<compile_context>
chip_gen: v7x
topology: tpu7x:2x2x1
jax: 0.10.0
libtpu: 0.0.40
codegen_flags: <defaults>
</compile_context>

<pallas_src>
import numpy as np
import jax
import jax.numpy as jnp
from jax import lax
from jax.experimental import pallas as pl
from jax.experimental.pallas import tpu as pltpu


# ----------------------------------------------------------------------------
# Wrapper-side (plain JAX) construction of the separable interpolation matrices
# ----------------------------------------------------------------------------
def _interp_matrices(rois, H, W, PH, PW, sampling_ratio, aligned):
    """Returns Sy (K, PH, H) (scaled by 1/count) and Sx (K, PW, W), float32."""
    f32 = jnp.float32
    K = rois.shape[0]
    exact = sampling_ratio > 0
    offset = 0.5 if aligned else 0.0

    start_w = rois[:, 1] - offset
    start_h = rois[:, 2] - offset
    roi_w = rois[:, 3] - rois[:, 1]
    roi_h = rois[:, 4] - rois[:, 2]
    if not aligned:
        roi_w = jnp.maximum(roi_w, 1.0)
        roi_h = jnp.maximum(roi_h, 1.0)
    bin_h = roi_h / PH
    bin_w = roi_w / PW

    if exact:
        IY = IX = int(sampling_ratio)
        gh = jnp.full((K,), float(sampling_ratio), f32)
        gw = jnp.full((K,), float(sampling_ratio), f32)
        count = jnp.full((K,), float(max(sampling_ratio * sampling_ratio, 1)), f32)
    else:
        # Capped sample count: grid_h = ceil(roi_h/PH) <= ceil(H/PH) whenever the
        # ROI lies inside the image (the usual detector case).
        # TODO(synk): ROIs extending past the image would need a larger cap.
        IY = max(-(-H // PH), 1)
        IX = max(-(-W // PW), 1)
        gh = jnp.ceil(roi_h / PH)
        gw = jnp.ceil(roi_w / PW)
        count = jnp.maximum(gh * gw, 1.0)

    # max(grid, 1) in the divisor avoids 0/0 NaN for degenerate (zero-size) boxes;
    # their samples are masked below so the output is exactly 0, as in torch.
    step_h = bin_h / jnp.maximum(gh, 1.0)
    step_w = bin_w / jnp.maximum(gw, 1.0)
    inv_count = 1.0 / count

    def build(start, bin_size, step, grid, P, S, D):
        p = jnp.arange(P, dtype=f32)
        s = jnp.arange(S, dtype=f32)
        coord = (start[:, None, None]
                 + p[None, :, None] * bin_size[:, None, None]
                 + (s[None, None, :] + 0.5) * step[:, None, None])        # (K,P,S)
        # clamp-at-edges == torch's (y.clamp(min=0) + high-edge collapse) logic
        coord = jnp.clip(coord, 0.0, float(D - 1))
        if not exact:
            # adaptive sampling: samples s >= grid contribute nothing; push their
            # coordinate out of range so every tent tap is exactly 0.
            coord = jnp.where(s[None, None, :] < grid[:, None, None], coord, -2.0)
        d = jnp.arange(D, dtype=f32)
        taps = jnp.maximum(1.0 - jnp.abs(coord[..., None] - d), 0.0)      # (K,P,S,D)
        return jnp.sum(taps, axis=2)                                       # (K,P,D)

    Sy = build(start_h, bin_h, step_h, gh, PH, IY, H) * inv_count[:, None, None]
    Sx = build(start_w, bin_w, step_w, gw, PW, IX, W)
    return Sy.astype(f32), Sx.astype(f32)


# ----------------------------------------------------------------------------
# Pallas kernel + wrapper
# ----------------------------------------------------------------------------
def roi_align(images, rois, output_size, sampling_ratio=-1, aligned=False):
    """Pallas TPU RoIAlign.

    images: (B, C, H, W) float32
    rois:   (K, 5) float32, rows = [batch_idx, x1, y1, x2, y2] (pixel coords),
            assumed grouped by batch_idx (convert_boxes_to_roi_format emits them
            that way) so consecutive grid steps reuse the same image block.
    """
    images = jnp.asarray(images, jnp.float32)
    rois = jnp.asarray(rois, jnp.float32)
    B, C, H, W = images.shape
    K = rois.shape[0]
    PH, PW = output_size

    batch_ind = rois[:, 0].astype(jnp.int32)
    Sy, Sx = _interp_matrices(rois, H, W, PH, PW, sampling_ratio, aligned)

    # Present images as (B, C*H, W): the single per-ROI MXU matmul then contracts
    # W for all channels at once (no per-channel micro-matmul loop).
    images_flat = images.reshape(B, C * H, W)
    # NOTE: casting images_flat / Sx to bf16 here (f32 accumulate) would halve the
    # HBM->VMEM DMA bytes at detector scale; kept f32 for accuracy at these sizes.

    def kernel(batch_ind_ref, sy_ref, sx_ref, img_ref, out_ref):
        del batch_ind_ref  # consumed only by the image index_map
        sx = sx_ref[0]                                          # (PW, W)
        # Fused channel matmul: (C*H, W) x (W, PW)^T -> (C*H, PW) on the MXU.
        t1 = lax.dot_general(img_ref[0], sx, (((1,), (1,)), ((), ())),
                             preferred_element_type=jnp.float32)
        t2 = t1.reshape(C, H, PW)
        # H-contraction: PH is tiny and static; broadcast-multiply + sublane
        # reduce per pooled row (Sy rows already carry the 1/count scale).
        for p in range(PH):
            wy = sy_ref[0, p, :]                                # (H,)
            out_ref[0, :, p, :] = jnp.sum(
                t2 * wy[None, :, None], axis=1).astype(out_ref.dtype)

    # Explicit VMEM budget (v5e's default scoped limit is only 16 MiB); the image
    # block is double-buffered.
    block_bytes = 4 * (C * H * W + PH * H + PW * W + C * PH * PW + C * H * PW)
    vmem_limit = int(max(2 * block_bytes + (4 << 20), 32 * 1024 * 1024))
    # TODO(synk): detector-scale C*H*W on v7x (64 MiB VMEM) needs a channel-blocking
    # grid axis and/or bf16 image tiles; ROI-chunked lane-dense output slabs would
    # further cut per-step overhead for very large K.

    grid_spec = pltpu.PrefetchScalarGridSpec(
        num_scalar_prefetch=1,                  # batch_ind -> SMEM for the index_map
        grid=(K,),
        in_specs=[
            pl.BlockSpec((1, PH, H), lambda k, bi: (k, 0, 0)),          # Sy (scaled)
            pl.BlockSpec((1, PW, W), lambda k, bi: (k, 0, 0)),          # Sx
            pl.BlockSpec((1, C * H, W), lambda k, bi: (bi[k], 0, 0)),   # image of ROI k
        ],
        out_specs=pl.BlockSpec((1, C, PH, PW), lambda k, bi: (k, 0, 0, 0)),
    )

    return pl.pallas_call(
        kernel,
        grid_spec=grid_spec,
        out_shape=jax.ShapeDtypeStruct((K, C, PH, PW), jnp.float32),
        compiler_params=pltpu.CompilerParams(
            dimension_semantics=("parallel",),   # independent ROIs -> megacore-shardable
            vmem_limit_bytes=vmem_limit),
    )(batch_ind, Sy, Sx, images_flat)


def convert_boxes_to_roi_format(boxes):
    """boxes: list of (Ni, 4) xyxy pixel-coord arrays (one per image).

    ROIs are emitted grouped (sorted) by batch index, which lets the kernel reuse
    each image block across consecutive grid steps.
    """
    coords = jnp.concatenate([jnp.asarray(b, jnp.float32) for b in boxes], 0)
    idx = jnp.concatenate(
        [jnp.full((b.shape[0], 1), i, jnp.float32) for i, b in enumerate(boxes)], 0)
    return jnp.concatenate([idx, coords], axis=-1)


class RoIAlign:
    """Mirror of the torch module (no learnable parameters)."""

    def __init__(self, output_size, sampling_ratio=-1, aligned=False):
        if isinstance(output_size, int):
            output_size = (output_size, output_size)
        self._output_size = tuple(output_size)
        self._sampling_ratio = sampling_ratio
        self._aligned = aligned

    def __call__(self, images, boxes):
        if images.shape[0] != len(boxes):
            raise ValueError("images / boxes batch size mismatch")
        rois = convert_boxes_to_roi_format(boxes)
        return roi_align(images, rois, self._output_size,
                         self._sampling_ratio, self._aligned)


# ----------------------------------------------------------------------------
# Pure-numpy reference (mirrors the torch _roi_align semantics)
# ----------------------------------------------------------------------------
def roi_align_ref(images, rois, PH, PW, sampling_ratio, aligned):
    images = np.asarray(images, np.float64)
    rois = np.asarray(rois, np.float64)
    B, C, H, W = images.shape
    K = rois.shape[0]
    out = np.zeros((K, C, PH, PW), np.float64)
    off = 0.5 if aligned else 0.0
    for k in range(K):
        b = int(rois[k, 0])
        sw, sh, ew, eh = rois[k, 1] - off, rois[k, 2] - off, rois[k, 3] - off, rois[k, 4] - off
        rw, rh = ew - sw, eh - sh
        if not aligned:
            rw, rh = max(rw, 1.0), max(rh, 1.0)
        bsh, bsw = rh / PH, rw / PW
        if sampling_ratio > 0:
            gh = gw = sampling_ratio
            count = max(gh * gw, 1)
        else:
            gh, gw = int(np.ceil(rh / PH)), int(np.ceil(rw / PW))
            count = max(gh * gw, 1)
        for ph in range(PH):
            for pw in range(PW):
                acc = np.zeros((C,), np.float64)
                for iy in range(gh):
                    yy = max(sh + ph * bsh + (iy + 0.5) * bsh / gh, 0.0)
                    yl = int(yy)
                    if yl >= H - 1:
                        yl = yh = H - 1
                    else:
                        yh = yl + 1
                    ly = yy - yl
                    hy = 1.0 - ly
                    for ix in range(gw):
                        xx = max(sw + pw * bsw + (ix + 0.5) * bsw / gw, 0.0)
                        xl = int(xx)
                        if xl >= W - 1:
                            xl = xh = W - 1
                        else:
                            xh = xl + 1
                        lx = xx - xl
                        hx = 1.0 - lx
                        acc += (hy * hx * images[b, :, yl, xl]
                                + hy * lx * images[b, :, yl, xh]
                                + ly * hx * images[b, :, yh, xl]
                                + ly * lx * images[b, :, yh, xh])
                out[k, :, ph, pw] = acc / count
    return out


# ----------------------------------------------------------------------------
if __name__ == "__main__":
    key = jax.random.PRNGKey(0)
    kimg, kxy, kwh = jax.random.split(key, 3)

    B, C, H, W = 2, 4, 16, 16
    images = jax.random.normal(kimg, (B, C, H, W), dtype=jnp.float32)

    # 3 boxes on image 0, 2 boxes on image 1 (denormalized xyxy pixel coords).
    n_boxes = (3, 2)
    K = sum(n_boxes)
    xy1 = jax.random.uniform(kxy, (K, 2), minval=0.0, maxval=9.0)
    wh = jax.random.uniform(kwh, (K, 2), minval=1.0, maxval=6.0)
    xyxy = jnp.concatenate([xy1, xy1 + wh], axis=1).astype(jnp.float32)
    boxes = [xyxy[:3], xyxy[3:]]
    rois = convert_boxes_to_roi_format(boxes)

    configs = [
        ((4, 4), -1, False),   # adaptive sampling (module default)
        ((4, 4), 2, False),    # exact sampling
        ((4, 4), 2, True),     # aligned
    ]
    for output_size, sr, aligned in configs:
        mod = RoIAlign(output_size, sampling_ratio=sr, aligned=aligned)
        out = jax.block_until_ready(mod(images, boxes))
        ref = roi_align_ref(images, rois, output_size[0], output_size[1], sr, aligned)
        # default (non-HIGHEST) MXU precision -> bf16-pass matmul, so ~1e-2 tolerance
        np.testing.assert_allclose(np.asarray(out, np.float64), ref,
                                   rtol=2e-2, atol=2e-2)

    print("KERNEL_OK")
</pallas_src>

<mosaic_0001>
module attributes {stable_mosaic.version = 11 : i64} {
  func.func @kernel(%arg0: i32, %arg1: memref<5xi32, #tpu.memory_space<smem>>, %arg2: memref<1x4x16xf32, #tpu.memory_space<vmem>>, %arg3: memref<1x4x16xf32, #tpu.memory_space<vmem>>, %arg4: memref<1x64x16xf32, #tpu.memory_space<vmem>>, %arg5: memref<1x4x4x4xf32, #tpu.memory_space<vmem>>) attributes {dimension_semantics = [#tpu.dimension_semantics<parallel>], iteration_bounds = array<i64: 5>, scalar_prefetch = 1 : i64, scratch_operands = 0 : i64, tpu.core_type = #tpu.core_type<tc>, window_params = [{transform_indices = @transform_0, window_bounds = array<i64: 1, 4, 16>}, {transform_indices = @transform_1, window_bounds = array<i64: 1, 4, 16>}, {transform_indices = @transform_2, window_bounds = array<i64: 1, 64, 16>}, {transform_indices = @transform_3, window_bounds = array<i64: 1, 4, 4, 4>}]} {
    %c0 = arith.constant 0 : index
    %c0_0 = arith.constant 0 : index
    %c0_1 = arith.constant 0 : index
    %0 = vector.load %arg3[%c0, %c0_0, %c0_1] : memref<1x4x16xf32, #tpu.memory_space<vmem>>, vector<1x4x16xf32>
    %1 = vector.shape_cast %0 : vector<1x4x16xf32> to vector<4x16xf32>
    %c0_2 = arith.constant 0 : index
    %c0_3 = arith.constant 0 : index
    %c0_4 = arith.constant 0 : index
    %2 = vector.load %arg4[%c0_2, %c0_3, %c0_4] : memref<1x64x16xf32, #tpu.memory_space<vmem>>, vector<1x64x16xf32>
    %3 = vector.shape_cast %2 : vector<1x64x16xf32> to vector<64x16xf32>
    %cst = arith.constant dense<0.000000e+00> : vector<64x4xf32>
    %4 = tpu.matmul %3, %1, %cst {dimension_numbers = #tpu.dot_dimension_numbers<[1], [1], [0], [0], [0, 0, 1, 0], [], []>} : vector<64x16xf32>, vector<4x16xf32>, vector<64x4xf32> -> vector<64x4xf32>
    %5 = vector.shape_cast %4 : vector<64x4xf32> to vector<4x16x4xf32>
    %c0_5 = arith.constant 0 : index
    %c0_6 = arith.constant 0 : index
    %c0_7 = arith.constant 0 : index
    %6 = vector.load %arg2[%c0_5, %c0_6, %c0_7] : memref<1x4x16xf32, #tpu.memory_space<vmem>>, vector<1x1x16xf32>
    %7 = vector.shape_cast %6 : vector<1x1x16xf32> to vector<16xf32>
    %8 = vector.shape_cast %7 : vector<16xf32> to vector<1x16x1xf32>
    %9 = vector.broadcast %8 : vector<1x16x1xf32> to vector<4x16x4xf32>
    %10 = arith.mulf %5, %9 : vector<4x16x4xf32>
    %cst_8 = arith.constant dense<0.000000e+00> : vector<4x4xf32>
    %11 = vector.multi_reduction <add>, %10, %cst_8 [1] : vector<4x16x4xf32> to vector<4x4xf32>
    %c0_9 = arith.constant 0 : index
    %c0_10 = arith.constant 0 : index
    %c0_11 = arith.constant 0 : index
    %c0_12 = arith.constant 0 : index
    %12 = vector.load %arg5[%c0_9, %c0_10, %c0_11, %c0_12] : memref<1x4x4x4xf32, #tpu.memory_space<vmem>>, vector<1x4x1x4xf32>
    %13 = vector.shape_cast %12 : vector<1x4x1x4xf32> to vector<4x4xf32>
    %14 = vector.shape_cast %11 : vector<4x4xf32> to vector<1x4x1x4xf32>
    tpu.vector_store %arg5[%c0_9, %c0_10, %c0_11, %c0_12], %14 {strides = array<i32>} : memref<1x4x4x4xf32, #tpu.memory_space<vmem>>, vector<1x4x1x4xf32>,
    %c0_13 = arith.constant 0 : index
    %c1 = arith.constant 1 : index
    %c0_14 = arith.constant 0 : index
    %15 = vector.load %arg2[%c0_13, %c1, %c0_14] : memref<1x4x16xf32, #tpu.memory_space<vmem>>, vector<1x1x16xf32>
    %16 = vector.shape_cast %15 : vector<1x1x16xf32> to vector<16xf32>
    %17 = vector.shape_cast %16 : vector<16xf32> to vector<1x16x1xf32>
    %18 = vector.broadcast %17 : vector<1x16x1xf32> to vector<4x16x4xf32>
    %19 = arith.mulf %5, %18 : vector<4x16x4xf32>
    %cst_15 = arith.constant dense<0.000000e+00> : vector<4x4xf32>
    %20 = vector.multi_reduction <add>, %19, %cst_15 [1] : vector<4x16x4xf32> to vector<4x4xf32>
    %c0_16 = arith.constant 0 : index
    %c0_17 = arith.constant 0 : index
    %c1_18 = arith.constant 1 : index
    %c0_19 = arith.constant 0 : index
    %21 = vector.load %arg5[%c0_16, %c0_17, %c1_18, %c0_19] : memref<1x4x4x4xf32, #tpu.memory_space<vmem>>, vector<1x4x1x4xf32>
    %22 = vector.shape_cast %21 : vector<1x4x1x4xf32> to vector<4x4xf32>
    %23 = vector.shape_cast %20 : vector<4x4xf32> to vector<1x4x1x4xf32>
    tpu.vector_store %arg5[%c0_16, %c0_17, %c1_18, %c0_19], %23 {strides = array<i32>} : memref<1x4x4x4xf32, #tpu.memory_space<vmem>>, vector<1x4x1x4xf32>,
    %c0_20 = arith.constant 0 : index
    %c2 = arith.constant 2 : index
    %c0_21 = arith.constant 0 : index
    %24 = vector.load %arg2[%c0_20, %c2, %c0_21] : memref<1x4x16xf32, #tpu.memory_space<vmem>>, vector<1x1x16xf32>
    %25 = vector.shape_cast %24 : vector<1x1x16xf32> to vector<16xf32>
    %26 = vector.shape_cast %25 : vector<16xf32> to vector<1x16x1xf32>
    %27 = vector.broadcast %26 : vector<1x16x1xf32> to vector<4x16x4xf32>
    %28 = arith.mulf %5, %27 : vector<4x16x4xf32>
    %cst_22 = arith.constant dense<0.000000e+00> : vector<4x4xf32>
    %29 = vector.multi_reduction <add>, %28, %cst_22 [1] : vector<4x16x4xf32> to vector<4x4xf32>
    %c0_23 = arith.constant 0 : index
    %c0_24 = arith.constant 0 : index
    %c2_25 = arith.constant 2 : index
    %c0_26 = arith.constant 0 : index
    %30 = vector.load %arg5[%c0_23, %c0_24, %c2_25, %c0_26] : memref<1x4x4x4xf32, #tpu.memory_space<vmem>>, vector<1x4x1x4xf32>
    %31 = vector.shape_cast %30 : vector<1x4x1x4xf32> to vector<4x4xf32>
    %32 = vector.shape_cast %29 : vector<4x4xf32> to vector<1x4x1x4xf32>
    tpu.vector_store %arg5[%c0_23, %c0_24, %c2_25, %c0_26], %32 {strides = array<i32>} : memref<1x4x4x4xf32, #tpu.memory_space<vmem>>, vector<1x4x1x4xf32>,
    %c0_27 = arith.constant 0 : index
    %c3 = arith.constant 3 : index
    %c0_28 = arith.constant 0 : index
    %33 = vector.load %arg2[%c0_27, %c3, %c0_28] : memref<1x4x16xf32, #tpu.memory_space<vmem>>, vector<1x1x16xf32>
    %34 = vector.shape_cast %33 : vector<1x1x16xf32> to vector<16xf32>
    %35 = vector.shape_cast %34 : vector<16xf32> to vector<1x16x1xf32>
    %36 = vector.broadcast %35 : vector<1x16x1xf32> to vector<4x16x4xf32>
    %37 = arith.mulf %5, %36 : vector<4x16x4xf32>
    %cst_29 = arith.constant dense<0.000000e+00> : vector<4x4xf32>
    %38 = vector.multi_reduction <add>, %37, %cst_29 [1] : vector<4x16x4xf32> to vector<4x4xf32>
    %c0_30 = arith.constant 0 : index
    %c0_31 = arith.constant 0 : index
    %c3_32 = arith.constant 3 : index
    %c0_33 = arith.constant 0 : index
    %39 = vector.load %arg5[%c0_30, %c0_31, %c3_32, %c0_33] : memref<1x4x4x4xf32, #tpu.memory_space<vmem>>, vector<1x4x1x4xf32>
    %40 = vector.shape_cast %39 : vector<1x4x1x4xf32> to vector<4x4xf32>
    %41 = vector.shape_cast %38 : vector<4x4xf32> to vector<1x4x1x4xf32>
    tpu.vector_store %arg5[%c0_30, %c0_31, %c3_32, %c0_33], %41 {strides = array<i32>} : memref<1x4x4x4xf32, #tpu.memory_space<vmem>>, vector<1x4x1x4xf32>,
    return
  }
  func.func @transform_0(%arg0: i32, %arg1: memref<5xi32, #tpu.memory_space<smem>>) -> (i32, i32, i32) {
    %c0_i32 = arith.constant 0 : i32
    %c0_i32_0 = arith.constant 0 : i32
    %c0_i32_1 = arith.constant 0 : i32
    return %arg0, %c0_i32, %c0_i32_0 : i32, i32, i32
  }
  func.func @transform_1(%arg0: i32, %arg1: memref<5xi32, #tpu.memory_space<smem>>) -> (i32, i32, i32) {
    %c0_i32 = arith.constant 0 : i32
    %c0_i32_0 = arith.constant 0 : i32
    %c0_i32_1 = arith.constant 0 : i32
    return %arg0, %c0_i32, %c0_i32_0 : i32, i32, i32
  }
  func.func @transform_2(%arg0: i32, %arg1: memref<5xi32, #tpu.memory_space<smem>>) -> (i32, i32, i32) {
    %0 = arith.index_cast %arg0 : i32 to index
    %1 = memref.load %arg1[%0] : memref<5xi32, #tpu.memory_space<smem>>
    %c0_i32 = arith.constant 0 : i32
    %c0_i32_0 = arith.constant 0 : i32
    %c0_i32_1 = arith.constant 0 : i32
    return %1, %c0_i32, %c0_i32_0 : i32, i32, i32
  }
  func.func @transform_3(%arg0: i32, %arg1: memref<5xi32, #tpu.memory_space<smem>>) -> (i32, i32, i32, i32) {
    %c0_i32 = arith.constant 0 : i32
    %c0_i32_0 = arith.constant 0 : i32
    %c0_i32_1 = arith.constant 0 : i32
    %c0_i32_2 = arith.constant 0 : i32
    return %arg0, %c0_i32, %c0_i32_0, %c0_i32_1 : i32, i32, i32, i32
  }
}

</mosaic_0001>

<llo_original>
// kernel: tpu_custom_call.1
$region0: #{tpu_custom_call.1}
  #allocation0 [shape = 'u32[]', space=smem, size = 0x4, offset = 0x4, fixed_abs, tag = 'smem constant byte address 0x4 - core index']
  #allocation1 [shape = 'u32[144,128]{1,0:T(1,128)}', space=vmem, size = 0x12000, scoped, tag = 'internal scratch']
  #allocation2 [shape = 's32[1]{0}', space=sflag, size = 0x4, scoped, tag = 'scoped memory for tpu_custom_call.1']
  #allocation3 [shape = 'u8[512]{0}', space=smem, size = 0x200, scoped, tag = 'prefetched SMEM operand 0']
  %s0 = inlined_call_operand.vmem [shape: s32[5], index: 0, kind: input, shape index: {}]
  %s1 = inlined_call_operand.vmem [shape: f32[5,4,16], index: 1, kind: input, shape index: {}]
  %s2 = inlined_call_operand.vmem [shape: f32[5,4,16], index: 2, kind: input, shape index: {}]
  %s3 = inlined_call_operand.vmem [shape: f32[2,64,16], index: 3, kind: input, shape index: {}]
  %s4 = inlined_call_operand.vmem [shape: f32[5,4,4,4], index: 4, kind: output, shape index: {}]
  %s5 = sld [smem:[#allocation0]]
  $region45: #{tpu_custom_call.1} parent=0
    _
  %s7 = ssub.s32 1, %s5
  %s8 = scalar_select 0, %s7, %s5
  %s9 = sshll.u32 %s0, 4
  %s10 = int_to_ptr.vmem [resolvable:$true] %s9
  %12 = dma.vmem_to_smem %s10, 16, [#allocation3], [#allocation2]
  %13 = dma.done [#allocation2], 16
  %14 = sfence
  loop: start=0, step=1, limit=7
  $region2: #{tpu_custom_call.1} parent=0 // loop_pre_header
    _
  $region3: #{tpu_custom_call.1} parent=0 // loop_header
    %s16 = sphi 0, %s20
    %p17 = scmp.ge.s32.totalorder %s16, 7
    %s26 = sphi 0, %s28
    %s29 = sphi 0, %s26
    %s30 = sphi 0, %s29
    %s46 = sphi 0, %s30
    %s52 = sphi 0, %s54
    %s55 = sphi 0, %s52
    %s56 = sphi 0, %s55
    %s72 = sphi 0, %s56
    %s80 = sphi 0, %s82
    %s83 = sphi 0, %s80
    %s84 = sphi 0, %s83
    %s100 = sphi 0, %s84
    %s106 = sphi 0, %s108
    %s109 = sphi 0, %s106
    %s110 = sphi 0, %s109
    %s126 = sphi 0, %s110
  $region4: #{tpu_custom_call.1} parent=0 // loop_header_branch
    %19 = sbr.rel (%p17) target = $region8
  $region5: #{tpu_custom_call.1} parent=0 // loop_body
    %s21 = ssub.s32 %s16, 1
    %s22 = ssub.s32 %s16, 2
    %s23 = sadd.s32 %s16, 1
    %s24 = ssub.s32 %s16, %s23
    %p25 = scmp.eq.s32.totalorder %s24, 0
    %s27 = sadd.s32 %s26, 1
    %s28 = scalar_select %p25, %s26, %s27
    %p31 = pneg %p25
    %p32 = scmp.eq.s32.totalorder %s16, 4
    %p33 = por %p31, %p32
    %p34 = scmp.ne.s32.totalorder %s26, %s29
    %p35 = scmp.eq.s32.totalorder %s16, 0
    %p36 = por %p34, %p35
    %p37 = scmp.ne.s32.totalorder %s26, %s29
    %p38 = scmp.eq.s32.totalorder %s21, 4
    %p39 = por %p37, %p38
    %p40 = scmp.ne.s32.totalorder %s29, %s30
    %p41 = scmp.eq.s32.totalorder %s21, 0
    %p42 = por %p40, %p41
    %p43 = scmp.ne.s32.totalorder %s29, %s30
    %p44 = scmp.eq.s32.totalorder %s22, 4
    %p45 = por %p43, %p44
    %p47 = scmp.ne.s32.totalorder %s30, %s46
    %p48 = scmp.eq.s32.totalorder %s22, 0
    %p49 = por %p47, %p48
    %s50 = ssub.s32 %s16, %s23
    %p51 = scmp.eq.s32.totalorder %s50, 0
    %s53 = sadd.s32 %s52, 1
    %s54 = scalar_select %p51, %s52, %s53
    %p57 = pneg %p51
    %p58 = scmp.eq.s32.totalorder %s16, 4
    %p59 = por %p57, %p58
    %p60 = scmp.ne.s32.totalorder %s52, %s55
    %p61 = scmp.eq.s32.totalorder %s16, 0
    %p62 = por %p60, %p61
    %p63 = scmp.ne.s32.totalorder %s52, %s55
    %p64 = scmp.eq.s32.totalorder %s21, 4
    %p65 = por %p63, %p64
    %p66 = scmp.ne.s32.totalorder %s55, %s56
    %p67 = scmp.eq.s32.totalorder %s21, 0
    %p68 = por %p66, %p67
    %p69 = scmp.ne.s32.totalorder %s55, %s56
    %p70 = scmp.eq.s32.totalorder %s22, 4
    %p71 = por %p69, %p70
    %p73 = scmp.ne.s32.totalorder %s56, %s72
    %p74 = scmp.eq.s32.totalorder %s22, 0
    %p75 = por %p73, %p74
    %s76 = sld [smem:[#allocation3 + %s16]]
    %s77 = sld [smem:[#allocation3 + %s23]]
    %s78 = ssub.s32 %s76, %s77
    %p79 = scmp.eq.s32.totalorder %s78, 0
    %s81 = sadd.s32 %s80, 1
    %s82 = scalar_select %p79, %s80, %s81
    %p85 = pneg %p79
    %p86 = scmp.eq.s32.totalorder %s16, 4
    %p87 = por %p85, %p86
    %p88 = scmp.ne.s32.totalorder %s80, %s83
    %p89 = scmp.eq.s32.totalorder %s16, 0
    %p90 = por %p88, %p89
    %p91 = scmp.ne.s32.totalorder %s80, %s83
    %p92 = scmp.eq.s32.totalorder %s21, 4
    %p93 = por %p91, %p92
    %p94 = scmp.ne.s32.totalorder %s83, %s84
    %p95 = scmp.eq.s32.totalorder %s21, 0
    %p96 = por %p94, %p95
    %p97 = scmp.ne.s32.totalorder %s83, %s84
    %p98 = scmp.eq.s32.totalorder %s22, 4
    %p99 = por %p97, %p98
    %p101 = scmp.ne.s32.totalorder %s84, %s100
    %p102 = scmp.eq.s32.totalorder %s22, 0
    %p103 = por %p101, %p102
    %s104 = ssub.s32 %s16, %s23
    %p105 = scmp.eq.s32.totalorder %s104, 0
    %s107 = sadd.s32 %s106, 1
    %s108 = scalar_select %p105, %s106, %s107
    %p111 = pneg %p105
    %p112 = scmp.eq.s32.totalorder %s16, 4
    %p113 = por %p111, %p112
    %p114 = scmp.ne.s32.totalorder %s106, %s109
    %p115 = scmp.eq.s32.totalorder %s16, 0
    %p116 = por %p114, %p115
    %p117 = scmp.ne.s32.totalorder %s106, %s109
    %p118 = scmp.eq.s32.totalorder %s21, 4
    %p119 = por %p117, %p118
    %p120 = scmp.ne.s32.totalorder %s109, %s110
    %p121 = scmp.eq.s32.totalorder %s21, 0
    %p122 = por %p120, %p121
    %p123 = scmp.ne.s32.totalorder %s109, %s110
    %p124 = scmp.eq.s32.totalorder %s22, 4
    %p125 = por %p123, %p124
    %p127 = scmp.ne.s32.totalorder %s110, %s126
    %p128 = scmp.eq.s32.totalorder %s22, 0
    %p129 = por %p127, %p128
    %p130 = scmp.le.s32.totalorder 1, %s16
    %p131 = scmp.lt.s32.totalorder %s16, 6
    %p132 = pnand %p130, %p131
    %p133 = pneg %p132
    // Predicated region
    $region9: #{tpu_custom_call.1} parent=5 // pred_check
      _
    $region10: #{tpu_custom_call.1} parent=5 // pred_check_branch
      %135 = sbr.rel (%p132) target = $region12
    $region11: #{tpu_custom_call.1} parent=5 // pred_region
      %s136 = ssub.s32 %s16, 1
    $region12: #{tpu_custom_call.1} parent=5 // pred_fallthru
      _
    %p137 = scmp.lt.s32.totalorder %s16, 5
    // Predicated region
    $region13: #{tpu_custom_call.1} parent=5 // pred_check
      %p138 = pneg %p137
    $region14: #{tpu_custom_call.1} parent=5 // pred_check_branch
      %140 = sbr.rel (%p138) target = $region16
    $region15: #{tpu_custom_call.1} parent=5 // pred_region
      // Predicated region
      $region17: #{tpu_custom_call.1} parent=15 // pred_check
        %p141 = pneg %p36
      $region18: #{tpu_custom_call.1} parent=15 // pred_check_branch
        %143 = sbr.rel (%p141) target = $region20
      $region19: #{tpu_custom_call.1} parent=15 // pred_region
        %p144 = scmp.lt.s32.totalorder %s16, 4
        %s145 = scalar_select %p144, %s16, 4
        %s146 = smul.addr %s145, 4
        %s147 = scalar_lea.vmem %s1, %s146
      $region20: #{tpu_custom_call.1} parent=15 // pred_fallthru
        _
      // Predicated region
      $region21: #{tpu_custom_call.1} parent=15 // pred_check
        %p148 = pneg %p62
      $region22: #{tpu_custom_call.1} parent=15 // pred_check_branch
        %150 = sbr.rel (%p148) target = $region24
      $region23: #{tpu_custom_call.1} parent=15 // pred_region
        %p151 = scmp.lt.s32.totalorder %s16, 4
        %s152 = scalar_select %p151, %s16, 4
        %s153 = smul.addr %s152, 4
        %s154 = scalar_lea.vmem %s2, %s153
      $region24: #{tpu_custom_call.1} parent=15 // pred_fallthru
        _
      // Predicated region
      $region25: #{tpu_custom_call.1} parent=15 // pred_check
        %p155 = pneg %p90
      $region26: #{tpu_custom_call.1} parent=15 // pred_check_branch
        %157 = sbr.rel (%p155) target = $region28
      $region27: #{tpu_custom_call.1} parent=15 // pred_region
        %s158 = sld [smem:[#allocation3 + %s16]]
        %p159 = scmp.lt.s32.totalorder %s158, 1
        %s160 = scalar_select %p159, %s158, 1
        %s161 = smul.addr %s160, 8
        %s162 = smul.addr %s161, 8
        %s163 = scalar_lea.vmem %s3, %s162
        %s164 = sld [smem:[#allocation3 + %s16]]
      $region28: #{tpu_custom_call.1} parent=15 // pred_fallthru
        _
    $region16: #{tpu_custom_call.1} parent=5 // pred_fallthru
      _
    %p165 = scmp.le.s32.totalorder 1, %s16
    %p166 = scmp.lt.s32.totalorder %s16, 6
    %p167 = pnand %p165, %p166
    %p168 = pneg %p167
    // Predicated region
    $region29: #{tpu_custom_call.1} parent=5 // pred_check
      _
    $region30: #{tpu_custom_call.1} parent=5 // pred_check_branch
      %170 = sbr.rel (%p167) target = $region32
    $region31: #{tpu_custom_call.1} parent=5 // pred_region
      %s171 = ssub.s32 %s16, 1
      %p172 = scmp.lt.s32.totalorder %s21, 4
      %s173 = scalar_select %p172, %s21, 4
      %s174 = smul.addr %s173, 4
      %s175 = scalar_lea.vmem %s1, %s174
      %p176 = pneg %p42
      %p177 = pneg %p39
      %p178 = scmp.lt.s32.totalorder %s21, 4
      %s179 = scalar_select %p178, %s21, 4
      %s180 = smul.addr %s179, 4
      %s181 = scalar_lea.vmem %s2, %s180
      %p182 = pneg %p68
      %p183 = pneg %p65
      %s184 = sld [smem:[#allocation3 + %s21]]
      %p185 = scmp.lt.s32.totalorder %s184, 1
      %s186 = scalar_select %p185, %s184, 1
      %s187 = smul.addr %s186, 8
      %s188 = smul.addr %s187, 8
      %s189 = scalar_lea.vmem %s3, %s188
      %p190 = pneg %p96
      %p191 = pneg %p93
      %p192 = pneg %p122
      %p193 = pneg %p119
      %p194 = scmp.lt.s32.totalorder %s21, 4
      %s195 = scalar_select %p194, %s21, 4
      %s196 = smul.addr %s195, 4
      %s197 = smul.addr %s196, 4
      %s198 = scalar_lea.vmem %s4, %s197
      %p199 = scmp.lt.s32.totalorder %s21, 4
      %s200 = scalar_select %p199, %s21, 4
      %s201 = smul.addr %s200, 4
      %s202 = scalar_lea.vmem %s1, %s201
      %p203 = scmp.lt.s32.totalorder %s21, 4
      %s204 = scalar_select %p203, %s21, 4
      %s205 = smul.addr %s204, 4
      %s206 = scalar_lea.vmem %s2, %s205
      %s207 = sld [smem:[#allocation3 + %s21]]
      %p208 = scmp.lt.s32.totalorder %s207, 1
      %s209 = scalar_select %p208, %s207, 1
      %s210 = smul.addr %s209, 8
      %s211 = smul.addr %s210, 8
      %s212 = scalar_lea.vmem %s3, %s211
      %s213 = sld [smem:[#allocation3 + %s21]]
      %p214 = scmp.lt.s32.totalorder %s21, 4
      %s215 = scalar_select %p214, %s21, 4
      %s216 = smul.addr %s215, 4
      %s217 = smul.addr %s216, 4
      %s218 = scalar_lea.vmem %s4, %s217
      %v219 = vld [vmem:[%s206] sm:$0xf]
      %v220 = vld [vmem:[%s212] sm:$0xff]
      %v221 = vld [vmem:[%s212 + $0x8] sm:$0xff]
      %v222 = vld [vmem:[%s212 + $0x10] sm:$0xff]
      %v223 = vld [vmem:[%s212 + $0x18] sm:$0xff]
      %v224 = vld [vmem:[%s212 + $0x20] sm:$0xff]
      %v225 = vld [vmem:[%s212 + $0x28] sm:$0xff]
      %v226 = vld [vmem:[%s212 + $0x30] sm:$0xff]
      %v227 = vld [vmem:[%s212 + $0x38] sm:$0xff]
      %vm228 = vcmask 130048
      %v230 = vsel %vm228, %v220, 0
      %v233 = vsel %vm228, %v221, 0
      %v236 = vsel %vm228, %v222, 0
      %v239 = vsel %vm228, %v223, 0
      %v242 = vsel %vm228, %v224, 0
      %v245 = vsel %vm228, %v225, 0
      %v248 = vsel %vm228, %v226, 0
      %v251 = vsel %vm228, %v227, 0
      %v254 = vsel %vm228, %v219, 0
      %256 = vmatprep.subr.mxu0 0.0
      %257 = vmatpush1.xpose.msra.mxu0 %v254
      %258 = vmatprep.subr.mxu0 0.0
      %259 = vmatpush1.xpose.msra.mxu0 0.0
      %260 = vmatprep.subr.mxu0 0.0
      %261 = vmatpush1.xpose.msra.mxu0 0.0
      %262 = vmatprep.subr.mxu0 0.0
      %263 = vmatpush1.xpose.msra.mxu0 0.0
      %264 = vmatprep.subr.mxu0 0.0
      %265 = vmatpush1.xpose.msra.mxu0 0.0
      %266 = vmatprep.subr.mxu0 0.0
      %267 = vmatpush1.xpose.msra.mxu0 0.0
      %268 = vmatprep.subr.mxu0 0.0
      %269 = vmatpush1.xpose.msra.mxu0 0.0
      %270 = vmatprep.subr.mxu0 0.0
      %271 = vmatpush1.xpose.msra.mxu0 0.0
      %272 = vmatprep.subr.mxu0 0.0
      %273 = vmatpush1.xpose.msra.mxu0 0.0
      %274 = vmatprep.subr.mxu0 0.0
      %275 = vmatpush1.xpose.msra.mxu0 0.0
      %276 = vmatprep.subr.mxu0 0.0
      %277 = vmatpush1.xpose.msra.mxu0 0.0
      %278 = vmatprep.subr.mxu0 0.0
      %279 = vmatpush1.xpose.msra.mxu0 0.0
      %280 = vmatprep.subr.mxu0 0.0
      %281 = vmatpush1.xpose.msra.mxu0 0.0
      %282 = vmatprep.subr.mxu0 0.0
      %283 = vmatpush1.xpose.msra.mxu0 0.0
      %284 = vmatprep.subr.mxu0 0.0
      %285 = vmatpush1.xpose.msra.mxu0 0.0
      %286 = vmatprep.subr.mxu0 0.0
      %287 = vmatpush1.xpose.msra.mxu0 0.0
      %288 = vmatprep.subr.mxu0 0.0
      %289 = vmatpush1.xpose.msra.mxu0 0.0
      %290 = vmatprep.subr.mxu0 0.0
      %291 = vmatpush1.xpose.msra.mxu0 0.0
      %292 = vmatprep.subr.mxu0 0.0
      %293 = vmatpush1.xpose.msra.mxu0 0.0
      %294 = vmatprep.subr.mxu0 0.0
      %295 = vmatpush1.xpose.msra.mxu0 0.0
      %296 = vmatprep.subr.mxu0 0.0
      %297 = vmatpush1.xpose.msra.mxu0 0.0
      %298 = vmatprep.subr.mxu0 0.0
      %299 = vmatpush1.xpose.msra.mxu0 0.0
      %300 = vmatprep.subr.mxu0 0.0
      %301 = vmatpush1.xpose.msra.mxu0 0.0
      %302 = vmatprep.subr.mxu0 0.0
      %303 = vmatpush1.xpose.msra.mxu0 0.0
      %304 = vmatprep.subr.mxu0 0.0
      %305 = vmatpush1.xpose.msra.mxu0 0.0
      %306 = vmatprep.subr.mxu0 0.0
      %307 = vmatpush1.xpose.msra.mxu0 0.0
      %308 = vmatprep.subr.mxu0 0.0
      %309 = vmatpush1.xpose.msra.mxu0 0.0
      %310 = vmatprep.subr.mxu0 0.0
      %311 = vmatpush1.xpose.msra.mxu0 0.0
      %312 = vmatprep.subr.mxu0 0.0
      %313 = vmatpush1.xpose.msra.mxu0 0.0
      %314 = vmatprep.subr.mxu0 0.0
      %315 = vmatpush1.xpose.msra.mxu0 0.0
      %316 = vmatprep.subr.mxu0 0.0
      %317 = vmatpush1.xpose.msra.mxu0 0.0
      %318 = vmatprep.subr.mxu0 0.0
      %319 = vmatpush1.xpose.msra.mxu0 0.0
      %320 = vmatprep.mubr.f32.mxu0 0.0
      %321 = vmatmul.mubr.f32.gmra.mrb[0].mxu0 %v230
      %v322 = vpop.f32.mrb[0].mxu0
      %v323 = vadd.f32 0.0, %v322
      %v324 = vpop.f32.mrb[0].mxu0
      %325 = vmatprep.mubr.f32.mxu0 0.0
      %326 = vmatmul.mubr.f32.gmra.mrb[0].mxu0 %v233
      %v327 = vpop.f32.mrb[0].mxu0
      %v328 = vadd.f32 0.0, %v327
      %v329 = vpop.f32.mrb[0].mxu0
      %330 = vmatprep.mubr.f32.mxu0 0.0
      %331 = vmatmul.mubr.f32.gmra.mrb[0].mxu0 %v236
      %v332 = vpop.f32.mrb[0].mxu0
      %v333 = vadd.f32 0.0, %v332
      %v334 = vpop.f32.mrb[0].mxu0
      %335 = vmatprep.mubr.f32.mxu0 0.0
      %336 = vmatmul.mubr.f32.gmra.mrb[0].mxu0 %v239
      %v337 = vpop.f32.mrb[0].mxu0
      %v338 = vadd.f32 0.0, %v337
      %v339 = vpop.f32.mrb[0].mxu0
      %340 = vmatprep.mubr.f32.mxu0 0.0
      %341 = vmatmul.mubr.f32.gmra.mrb[0].mxu0 %v242
      %v342 = vpop.f32.mrb[0].mxu0
      %v343 = vadd.f32 0.0, %v342
      %v344 = vpop.f32.mrb[0].mxu0
      %345 = vmatprep.mubr.f32.mxu0 0.0
      %346 = vmatmul.mubr.f32.gmra.mrb[0].mxu0 %v245
      %v347 = vpop.f32.mrb[0].mxu0
      %v348 = vadd.f32 0.0, %v347
      %v349 = vpop.f32.mrb[0].mxu0
      %350 = vmatprep.mubr.f32.mxu0 0.0
      %351 = vmatmul.mubr.f32.gmra.mrb[0].mxu0 %v248
      %v352 = vpop.f32.mrb[0].mxu0
      %v353 = vadd.f32 0.0, %v352
      %v354 = vpop.f32.mrb[0].mxu0
      %355 = vmatprep.mubr.f32.mxu0 0.0
      %356 = vmatmul.mubr.f32.gmra.mrb[0].mxu0 %v251
      %v357 = vpop.f32.mrb[0].mxu0
      %v358 = vadd.f32 0.0, %v357
      %v359 = vpop.f32.mrb[0].mxu0
      %360 = vdwg.mxu0
      %v361 = vld [vmem:[%s202] sm:$0x1]
      %v362 = vlaneseq
      %v363 = vshrl.u32 %v362, 7
      %v364 = vsub.s32 0, %v363
      %v365 = vrot.slane %v361, %v364
      %367 = vbcast.lane.b32.xlu0 %v365, 256
      %v368 = vpop.permute.xlu0 %367
      %s370 = sor.u32 256, 8
      %371 = vbcast.lane.b32.xlu0 %v365, %s370
      %v372 = vpop.permute.xlu0 %371
      %v373 = vmul.f32 %v323, %v368
      %v374 = vmul.f32 %v328, %v372
      %v375 = vmul.f32 %v333, %v368
      %v376 = vmul.f32 %v338, %v372
      %v377 = vmul.f32 %v343, %v368
      %v378 = vmul.f32 %v348, %v372
      %v379 = vmul.f32 %v353, %v368
      %v380 = vmul.f32 %v358, %v372
      %vm381 = vcmask 31744
      %v382 = vsel %vm381, %v373, 0.0
      %v383 = vsel %vm381, %v374, 0.0
      %v384 = vadd.f32 %v382, %v383
      %v385 = vrot.slane %v384, 4
      %v386 = vadd.f32 %v384, %v385
      %v387 = vrot.slane %v386, 2
      %v388 = vadd.f32 %v386, %v387
      %v389 = vrot.slane %v388, 1
      %v390 = vadd.f32 %v388, %v389
      %v391 = vsel %vm381, %v375, 0.0
      %v392 = vsel %vm381, %v376, 0.0
      %v393 = vadd.f32 %v391, %v392
      %v394 = vrot.slane %v393, 4
      %v395 = vadd.f32 %v393, %v394
      %v396 = vrot.slane %v395, 2
      %v397 = vadd.f32 %v395, %v396
      %v398 = vrot.slane %v397, 1
      %v399 = vadd.f32 %v397, %v398
      %v400 = vsel %vm381, %v377, 0.0
      %v401 = vsel %vm381, %v378, 0.0
      %v402 = vadd.f32 %v400, %v401
      %v403 = vrot.slane %v402, 4
      %v404 = vadd.f32 %v402, %v403
      %v405 = vrot.slane %v404, 2
      %v406 = vadd.f32 %v404, %v405
      %v407 = vrot.slane %v406, 1
      %v408 = vadd.f32 %v406, %v407
      %v409 = vsel %vm381, %v379, 0.0
      %v410 = vsel %vm381, %v380, 0.0
      %v411 = vadd.f32 %v409, %v410
      %v412 = vrot.slane %v411, 4
      %v413 = vadd.f32 %v411, %v412
      %v414 = vrot.slane %v413, 2
      %v415 = vadd.f32 %v413, %v414
      %v416 = vrot.slane %v415, 1
      %v417 = vadd.f32 %v415, %v416
      %vm418 = vcmask 24576
      %419 = vst.msk [vmem:[%s218] sm:$0x1] %vm418, %v390
      %420 = vst.msk [vmem:[%s218 + $0x4] sm:$0x1] %vm418, %v399
      %421 = vst.msk [vmem:[%s218 + $0x8] sm:$0x1] %vm418, %v408
      %422 = vst.msk [vmem:[%s218 + $0xc] sm:$0x1] %vm418, %v417
      %v423 = vld [vmem:[%s202 + $0x1] sm:$0x1]
      %v424 = vlaneseq
      %v425 = vshrl.u32 %v424, 7
      %v426 = vsub.s32 0, %v425
      %v427 = vrot.slane %v423, %v426
      %429 = vbcast.lane.b32.xlu0 %v427, 256
      %v430 = vpop.permute.xlu0 %429
      %s432 = sor.u32 256, 8
      %433 = vbcast.lane.b32.xlu0 %v427, %s432
      %v434 = vpop.permute.xlu0 %433
      %v435 = vmul.f32 %v323, %v430
      %v436 = vmul.f32 %v328, %v434
      %v437 = vmul.f32 %v333, %v430
      %v438 = vmul.f32 %v338, %v434
      %v439 = vmul.f32 %v343, %v430
      %v440 = vmul.f32 %v348, %v434
      %v441 = vmul.f32 %v353, %v430
      %v442 = vmul.f32 %v358, %v434
      %v443 = vsel %vm381, %v435, 0.0
      %v444 = vsel %vm381, %v436, 0.0
      %v445 = vadd.f32 %v443, %v444
      %v446 = vrot.slane %v445, 4
      %v447 = vadd.f32 %v445, %v446
      %v448 = vrot.slane %v447, 2
      %v449 = vadd.f32 %v447, %v448
      %v450 = vrot.slane %v449, 1
      %v451 = vadd.f32 %v449, %v450
      %v452 = vsel %vm381, %v437, 0.0
      %v453 = vsel %vm381, %v438, 0.0
      %v454 = vadd.f32 %v452, %v453
      %v455 = vrot.slane %v454, 4
      %v456 = vadd.f32 %v454, %v455
      %v457 = vrot.slane %v456, 2
      %v458 = vadd.f32 %v456, %v457
      %v459 = vrot.slane %v458, 1
      %v460 = vadd.f32 %v458, %v459
      %v461 = vsel %vm381, %v439, 0.0
      %v462 = vsel %vm381, %v440, 0.0
      %v463 = vadd.f32 %v461, %v462
      %v464 = vrot.slane %v463, 4
      %v465 = vadd.f32 %v463, %v464
      %v466 = vrot.slane %v465, 2
      %v467 = vadd.f32 %v465, %v466
      %v468 = vrot.slane %v467, 1
      %v469 = vadd.f32 %v467, %v468
      %v470 = vsel %vm381, %v441, 0.0
      %v471 = vsel %vm381, %v442, 0.0
      %v472 = vadd.f32 %v470, %v471
      %v473 = vrot.slane %v472, 4
      %v474 = vadd.f32 %v472, %v473
      %v475 = vrot.slane %v474, 2
      %v476 = vadd.f32 %v474, %v475
      %v477 = vrot.slane %v476, 1
      %v478 = vadd.f32 %v476, %v477
      %479 = vst.msk [vmem:[%s218 + $0x1] sm:$0x1] %vm418, %v451
      %480 = vst.msk [vmem:[%s218 + $0x5] sm:$0x1] %vm418, %v460
      %481 = vst.msk [vmem:[%s218 + $0x9] sm:$0x1] %vm418, %v469
      %482 = vst.msk [vmem:[%s218 + $0xd] sm:$0x1] %vm418, %v478
      %v483 = vld [vmem:[%s202 + $0x2] sm:$0x1]
      %v484 = vlaneseq
      %v485 = vshrl.u32 %v484, 7
      %v486 = vsub.s32 0, %v485
      %v487 = vrot.slane %v483, %v486
      %489 = vbcast.lane.b32.xlu0 %v487, 256
      %v490 = vpop.permute.xlu0 %489
      %s492 = sor.u32 256, 8
      %493 = vbcast.lane.b32.xlu0 %v487, %s492
      %v494 = vpop.permute.xlu0 %493
      %v495 = vmul.f32 %v323, %v490
      %v496 = vmul.f32 %v328, %v494
      %v497 = vmul.f32 %v333, %v490
      %v498 = vmul.f32 %v338, %v494
      %v499 = vmul.f32 %v343, %v490
      %v500 = vmul.f32 %v348, %v494
      %v501 = vmul.f32 %v353, %v490
      %v502 = vmul.f32 %v358, %v494
      %v503 = vsel %vm381, %v495, 0.0
      %v504 = vsel %vm381, %v496, 0.0
      %v505 = vadd.f32 %v503, %v504
      %v506 = vrot.slane %v505, 4
      %v507 = vadd.f32 %v505, %v506
      %v508 = vrot.slane %v507, 2
      %v509 = vadd.f32 %v507, %v508
      %v510 = vrot.slane %v509, 1
      %v511 = vadd.f32 %v509, %v510
      %v512 = vsel %vm381, %v497, 0.0
      %v513 = vsel %vm381, %v498, 0.0
      %v514 = vadd.f32 %v512, %v513
      %v515 = vrot.slane %v514, 4
      %v516 = vadd.f32 %v514, %v515
      %v517 = vrot.slane %v516, 2
      %v518 = vadd.f32 %v516, %v517
      %v519 = vrot.slane %v518, 1
      %v520 = vadd.f32 %v518, %v519
      %v521 = vsel %vm381, %v499, 0.0
      %v522 = vsel %vm381, %v500, 0.0
      %v523 = vadd.f32 %v521, %v522
      %v524 = vrot.slane %v523, 4
      %v525 = vadd.f32 %v523, %v524
      %v526 = vrot.slane %v525, 2
      %v527 = vadd.f32 %v525, %v526
      %v528 = vrot.slane %v527, 1
      %v529 = vadd.f32 %v527, %v528
      %v530 = vsel %vm381, %v501, 0.0
      %v531 = vsel %vm381, %v502, 0.0
      %v532 = vadd.f32 %v530, %v531
      %v533 = vrot.slane %v532, 4
      %v534 = vadd.f32 %v532, %v533
      %v535 = vrot.slane %v534, 2
      %v536 = vadd.f32 %v534, %v535
      %v537 = vrot.slane %v536, 1
      %v538 = vadd.f32 %v536, %v537
      %539 = vst.msk [vmem:[%s218 + $0x2] sm:$0x1] %vm418, %v511
      %540 = vst.msk [vmem:[%s218 + $0x6] sm:$0x1] %vm418, %v520
      %541 = vst.msk [vmem:[%s218 + $0xa] sm:$0x1] %vm418, %v529
      %542 = vst.msk [vmem:[%s218 + $0xe] sm:$0x1] %vm418, %v538
      %v543 = vld [vmem:[%s202 + $0x3] sm:$0x1]
      %v544 = vlaneseq
      %v545 = vshrl.u32 %v544, 7
      %v546 = vsub.s32 0, %v545
      %v547 = vrot.slane %v543, %v546
      %549 = vbcast.lane.b32.xlu0 %v547, 256
      %v550 = vpop.permute.xlu0 %549
      %s552 = sor.u32 256, 8
      %553 = vbcast.lane.b32.xlu0 %v547, %s552
      %v554 = vpop.permute.xlu0 %553
      %v555 = vmul.f32 %v323, %v550
      %v556 = vmul.f32 %v328, %v554
      %v557 = vmul.f32 %v333, %v550
      %v558 = vmul.f32 %v338, %v554
      %v559 = vmul.f32 %v343, %v550
      %v560 = vmul.f32 %v348, %v554
      %v561 = vmul.f32 %v353, %v550
      %v562 = vmul.f32 %v358, %v554
      %v563 = vsel %vm381, %v555, 0.0
      %v564 = vsel %vm381, %v556, 0.0
      %v565 = vadd.f32 %v563, %v564
      %v566 = vrot.slane %v565, 4
      %v567 = vadd.f32 %v565, %v566
      %v568 = vrot.slane %v567, 2
      %v569 = vadd.f32 %v567, %v568
      %v570 = vrot.slane %v569, 1
      %v571 = vadd.f32 %v569, %v570
      %v572 = vsel %vm381, %v557, 0.0
      %v573 = vsel %vm381, %v558, 0.0
      %v574 = vadd.f32 %v572, %v573
      %v575 = vrot.slane %v574, 4
      %v576 = vadd.f32 %v574, %v575
      %v577 = vrot.slane %v576, 2
      %v578 = vadd.f32 %v576, %v577
      %v579 = vrot.slane %v578, 1
      %v580 = vadd.f32 %v578, %v579
      %v581 = vsel %vm381, %v559, 0.0
      %v582 = vsel %vm381, %v560, 0.0
      %v583 = vadd.f32 %v581, %v582
      %v584 = vrot.slane %v583, 4
      %v585 = vadd.f32 %v583, %v584
      %v586 = vrot.slane %v585, 2
      %v587 = vadd.f32 %v585, %v586
      %v588 = vrot.slane %v587, 1
      %v589 = vadd.f32 %v587, %v588
      %v590 = vsel %vm381, %v561, 0.0
      %v591 = vsel %vm381, %v562, 0.0
      %v592 = vadd.f32 %v590, %v591
      %v593 = vrot.slane %v592, 4
      %v594 = vadd.f32 %v592, %v593
      %v595 = vrot.slane %v594, 2
      %v596 = vadd.f32 %v594, %v595
      %v597 = vrot.slane %v596, 1
      %v598 = vadd.f32 %v596, %v597
      %599 = vst.msk [vmem:[%s218 + $0x3] sm:$0x1] %vm418, %v571
      %600 = vst.msk [vmem:[%s218 + $0x7] sm:$0x1] %vm418, %v580
      %601 = vst.msk [vmem:[%s218 + $0xb] sm:$0x1] %vm418, %v589
      %602 = vst.msk [vmem:[%s218 + $0xf] sm:$0x1] %vm418, %v598
      %p603 = scmp.lt.s32.totalorder %s21, 4
      %s604 = scalar_select %p603, %s21, 4
      %s605 = smul.addr %s604, 4
      %s606 = smul.addr %s605, 4
      %s607 = scalar_lea.vmem %s4, %s606
      // Predicated region
      $region33: #{tpu_custom_call.1} parent=31 // pred_check
        %p608 = pneg %p119
      $region34: #{tpu_custom_call.1} parent=31 // pred_check_branch
        %610 = sbr.rel (%p608) target = $region36
      $region35: #{tpu_custom_call.1} parent=31 // pred_region
        _
      $region36: #{tpu_custom_call.1} parent=31 // pred_fallthru
        _
    $region32: #{tpu_custom_call.1} parent=5 // pred_fallthru
      _
    %p611 = scmp.le.s32.totalorder 2, %s16
    // Predicated region
    $region37: #{tpu_custom_call.1} parent=5 // pred_check
      %p612 = pneg %p611
    $region38: #{tpu_custom_call.1} parent=5 // pred_check_branch
      %614 = sbr.rel (%p612) target = $region40
    $region39: #{tpu_custom_call.1} parent=5 // pred_region
      %s615 = ssub.s32 %s16, 2
      // Predicated region
      $region41: #{tpu_custom_call.1} parent=39 // pred_check
        %p616 = pneg %p125
      $region42: #{tpu_custom_call.1} parent=39 // pred_check_branch
        %618 = sbr.rel (%p616) target = $region44
      $region43: #{tpu_custom_call.1} parent=39 // pred_region
        %p619 = scmp.lt.s32.totalorder %s22, 4
        %s620 = scalar_select %p619, %s22, 4
        %s621 = smul.addr %s620, 4
        %s622 = smul.addr %s621, 4
        %s623 = scalar_lea.vmem %s4, %s622
      $region44: #{tpu_custom_call.1} parent=39 // pred_fallthru
        _
    $region40: #{tpu_custom_call.1} parent=5 // pred_fallthru
      _
  $region6: #{tpu_custom_call.1} parent=0 // loop_footer
    %s20 = sadd.s32 1, %s16
  $region7: #{tpu_custom_call.1} parent=0 // loop_footer_branch
    %15 = sbr.rel target = $region3
  $region8: #{tpu_custom_call.1} parent=0 // loop_exit
    _

</llo_original>
